<compile_context>
chip_gen: v7x
topology: tpu7x:2x2x1
jax: 0.10.0
libtpu: 0.0.40
codegen_flags: <defaults>
</compile_context>

<pallas_src>
import functools

import jax
import jax.numpy as jnp
from jax import lax
from jax.experimental import pallas as pl
from jax.experimental.pallas import tpu as pltpu


# --------------------------------------------------------------------------- #
# Kernels
# --------------------------------------------------------------------------- #
def _stats_kernel(x_ref, w_ref, sum_ref, ssq_ref):
    """Accumulate per-channel sum / sum-of-squares of y = x @ w over N-tiles."""
    @pl.when(pl.program_id(0) == 0)
    def _():
        sum_ref[...] = jnp.zeros_like(sum_ref)
        ssq_ref[...] = jnp.zeros_like(ssq_ref)

    y = jnp.dot(x_ref[...], w_ref[...], preferred_element_type=jnp.float32)  # (tn, C) f32
    sum_ref[...] += jnp.sum(y, axis=0, keepdims=True)        # (1, C) sublane reduce
    ssq_ref[...] += jnp.sum(y * y, axis=0, keepdims=True)    # (1, C)


def _apply_kernel(x_ref, w_ref, scale_ref, bias_ref, o_ref, *, negative_slope):
    """out = leaky_relu((x @ w) * scale + bias) in one streaming pass."""
    y = jnp.dot(x_ref[...], w_ref[...], preferred_element_type=jnp.float32)  # (tn, C) f32
    z = y * scale_ref[...] + bias_ref[...]                   # fused per-channel affine
    if negative_slope is not None:
        z = jnp.maximum(z, negative_slope * z)               # LeakyReLU(0.1)
    o_ref[...] = z.astype(o_ref.dtype)


# --------------------------------------------------------------------------- #
# Wrapper
# --------------------------------------------------------------------------- #
def _pick_tile_n(n, din, dout, itemsize, target_bytes=2 << 20):
    """Rows per tile so the biggest per-tile buffer is ~2 MiB (v7x-safe)."""
    row_bytes = max(din, dout) * itemsize
    tn = min(n, max(8, target_bytes // row_bytes))
    return int(max(8, (tn // 8) * 8))


def unary_block(x, w, gamma, beta, *, num_group, eps=1e-5, has_relu=True,
                negative_slope=0.1, tile_n=None):
    """UnaryBlock forward.

    x: (N, Din).  w: (Dout, Din) (nn.Linear weight).  gamma/beta: (Dout,).
    Returns squeeze(leaky_relu(group_norm(x @ w.T))).
    """
    n, din = x.shape
    dout, din_w = w.shape
    assert din_w == din
    assert dout % num_group == 0, "feature_dim must be divisible by num_group"
    cg = dout // num_group

    if tile_n is None:
        tile_n = _pick_tile_n(n, din, dout, x.dtype.itemsize)
    tile_n = max(8, (int(tile_n) // 8) * 8)

    num_tiles = pl.cdiv(n, tile_n)
    n_pad = num_tiles * tile_n
    # Zero padding: padded rows contribute exactly 0 to sum/sumsq (0 @ W = 0),
    # and their outputs are sliced off below, so stats use the true N.
    x_pad = x if n_pad == n else jnp.pad(x, ((0, n_pad - n), (0, 0)))

    w_t = jnp.transpose(w)  # (Din, Dout) -- matmul layout for the MXU

    # ---------------- Pass A: per-channel sum / sumsq over all points -------- #
    sum_c, ssq_c = pl.pallas_call(
        _stats_kernel,
        out_shape=(jax.ShapeDtypeStruct((1, dout), jnp.float32),
                   jax.ShapeDtypeStruct((1, dout), jnp.float32)),
        grid_spec=pltpu.PrefetchScalarGridSpec(
            num_scalar_prefetch=0,
            grid=(num_tiles,),
            in_specs=[
                pl.BlockSpec((tile_n, din), lambda i: (i, 0)),
                pl.BlockSpec((din, dout), lambda i: (0, 0)),
            ],
            out_specs=(
                pl.BlockSpec((1, dout), lambda i: (0, 0)),
                pl.BlockSpec((1, dout), lambda i: (0, 0)),
            ),
        ),
        compiler_params=pltpu.CompilerParams(
            dimension_semantics=("arbitrary",)),   # accumulator across tiles
    )(x_pad, w_t)

    # ---------------- Tiny glue: group stats -> per-channel scale/bias ------- #
    count = jnp.float32(n) * cg                               # true N, not padded
    g_sum = jnp.sum(sum_c.reshape(num_group, cg), axis=1)     # (G,)
    g_ssq = jnp.sum(ssq_c.reshape(num_group, cg), axis=1)     # (G,)
    mean_g = g_sum / count
    # var = E[y^2] - mean^2 keeps the stats pass single-read (f32 accumulation).
    # For inputs with |mean| >> std, switch to a diff^2 second stats pass.
    var_g = jnp.maximum(g_ssq / count - mean_g * mean_g, 0.0)
    inv_g = lax.rsqrt(var_g + eps)
    scale_c = gamma.astype(jnp.float32) * jnp.repeat(inv_g, cg)               # (C,)
    bias_c = beta.astype(jnp.float32) - jnp.repeat(mean_g, cg) * scale_c      # (C,)
    scale_2d = scale_c.reshape(1, dout)
    bias_2d = bias_c.reshape(1, dout)

    # ---------------- Pass B: streaming normalize + LeakyReLU ---------------- #
    apply_kernel = functools.partial(
        _apply_kernel, negative_slope=(negative_slope if has_relu else None))
    out_pad = pl.pallas_call(
        apply_kernel,
        out_shape=jax.ShapeDtypeStruct((n_pad, dout), x.dtype),
        grid_spec=pltpu.PrefetchScalarGridSpec(
            num_scalar_prefetch=0,
            grid=(num_tiles,),
            in_specs=[
                pl.BlockSpec((tile_n, din), lambda i: (i, 0)),
                pl.BlockSpec((din, dout), lambda i: (0, 0)),
                pl.BlockSpec((1, dout), lambda i: (0, 0)),
                pl.BlockSpec((1, dout), lambda i: (0, 0)),
            ],
            out_specs=pl.BlockSpec((tile_n, dout), lambda i: (i, 0)),
        ),
        compiler_params=pltpu.CompilerParams(
            dimension_semantics=("parallel",)),    # pure streaming -> megacore on v7x
    )(x_pad, w_t, scale_2d, bias_2d)

    out = out_pad if n_pad == n else out_pad[:n]
    # Mimic the trailing `.squeeze()` in GroupNorm.forward (shape-only glue).
    return jnp.squeeze(out)


# --------------------------------------------------------------------------- #
# Pure-JAX reference (mirrors torch: Linear -> GroupNorm on (1,C,N) -> LeakyReLU)
# --------------------------------------------------------------------------- #
def unary_block_ref(x, w, gamma, beta, *, num_group, eps=1e-5, has_relu=True,
                    negative_slope=0.1):
    y = jnp.dot(x.astype(jnp.float32), w.T.astype(jnp.float32),
                precision=lax.Precision.HIGHEST)
    n, c = y.shape
    cg = c // num_group
    yg = y.reshape(n, num_group, cg)
    mean = jnp.mean(yg, axis=(0, 2), keepdims=True)
    var = jnp.mean((yg - mean) ** 2, axis=(0, 2), keepdims=True)
    yn = ((yg - mean) / jnp.sqrt(var + eps)).reshape(n, c)
    out = yn * gamma.reshape(1, c) + beta.reshape(1, c)
    out = jnp.squeeze(out)
    if has_relu:
        out = jnp.where(out >= 0, out, negative_slope * out)
    return out.astype(x.dtype)


if __name__ == "__main__":
    num_points = 200     # not a multiple of the tile -> exercises padding path
    input_dim = 48
    output_dim = 32
    num_group = 4

    key = jax.random.PRNGKey(0)
    kx, kw, kg, kb = jax.random.split(key, 4)

    x = jax.random.normal(kx, (num_points, input_dim), dtype=jnp.float32)
    w = jax.random.normal(kw, (output_dim, input_dim), dtype=jnp.float32) / (input_dim ** 0.5)
    gamma = 1.0 + 0.1 * jax.random.normal(kg, (output_dim,), dtype=jnp.float32)
    beta = 0.1 * jax.random.normal(kb, (output_dim,), dtype=jnp.float32)

    # tile_n=64 forces a multi-tile grid (4 tiles + padding) even at this small N.
    out = unary_block(x, w, gamma, beta, num_group=num_group, tile_n=64)
    out = jax.block_until_ready(out)

    ref = unary_block_ref(x, w, gamma, beta, num_group=num_group)
    assert out.shape == ref.shape, (out.shape, ref.shape)
    assert jnp.allclose(out, ref, atol=1e-4, rtol=1e-4), \
        float(jnp.max(jnp.abs(out - ref)))

    print("KERNEL_OK")
</pallas_src>

<mosaic_0001>
module attributes {stable_mosaic.version = 11 : i64} {
  func.func @_stats_kernel(%arg0: i32, %arg1: memref<64x48xf32, #tpu.memory_space<vmem>>, %arg2: memref<48x32xf32, #tpu.memory_space<vmem>>, %arg3: memref<1x32xf32, #tpu.memory_space<vmem>>, %arg4: memref<1x32xf32, #tpu.memory_space<vmem>>) attributes {dimension_semantics = [#tpu.dimension_semantics<arbitrary>], iteration_bounds = array<i64: 4>, scalar_prefetch = 0 : i64, scratch_operands = 0 : i64, tpu.core_type = #tpu.core_type<tc>, window_params = [{transform_indices = @transform_0, window_bounds = array<i64: 64, 48>}, {pipeline_mode = #tpu.pipeline_mode<synchronous>, transform_indices = @transform_1, window_bounds = array<i64: 48, 32>}, {pipeline_mode = #tpu.pipeline_mode<synchronous>, transform_indices = @transform_2, window_bounds = array<i64: 1, 32>}, {pipeline_mode = #tpu.pipeline_mode<synchronous>, transform_indices = @transform_3, window_bounds = array<i64: 1, 32>}]} {
    %c0_i32 = arith.constant 0 : i32
    %0 = arith.cmpi eq, %arg0, %c0_i32 : i32
    %1 = arith.extui %0 : i1 to i32
    %c0_i32_0 = arith.constant 0 : i32
    %2 = arith.cmpi ne, %1, %c0_i32_0 : i32
    scf.if %2 {
      %cst_14 = arith.constant 0.000000e+00 : f32
      %17 = vector.broadcast %cst_14 : f32 to vector<1x32xf32>
      %c0_15 = arith.constant 0 : index
      %c0_16 = arith.constant 0 : index
      %18 = vector.load %arg3[%c0_15, %c0_16] : memref<1x32xf32, #tpu.memory_space<vmem>>, vector<1x32xf32>
      tpu.vector_store %arg3[%c0_15, %c0_16], %17 {strides = array<i32>} : memref<1x32xf32, #tpu.memory_space<vmem>>, vector<1x32xf32>,
      %cst_17 = arith.constant 0.000000e+00 : f32
      %19 = vector.broadcast %cst_17 : f32 to vector<1x32xf32>
      %c0_18 = arith.constant 0 : index
      %c0_19 = arith.constant 0 : index
      %20 = vector.load %arg4[%c0_18, %c0_19] : memref<1x32xf32, #tpu.memory_space<vmem>>, vector<1x32xf32>
      tpu.vector_store %arg4[%c0_18, %c0_19], %19 {strides = array<i32>} : memref<1x32xf32, #tpu.memory_space<vmem>>, vector<1x32xf32>,
    } else {
    }
    %c0 = arith.constant 0 : index
    %c0_1 = arith.constant 0 : index
    %3 = vector.load %arg1[%c0, %c0_1] : memref<64x48xf32, #tpu.memory_space<vmem>>, vector<64x48xf32>
    %c0_2 = arith.constant 0 : index
    %c0_3 = arith.constant 0 : index
    %4 = vector.load %arg2[%c0_2, %c0_3] : memref<48x32xf32, #tpu.memory_space<vmem>>, vector<48x32xf32>
    %cst = arith.constant dense<0.000000e+00> : vector<64x32xf32>
    %5 = tpu.matmul %3, %4, %cst {dimension_numbers = #tpu.dot_dimension_numbers<[1], [0], [0], [1], [0, 0, 1, 1], [], []>} : vector<64x48xf32>, vector<48x32xf32>, vector<64x32xf32> -> vector<64x32xf32>
    %c0_4 = arith.constant 0 : index
    %c0_5 = arith.constant 0 : index
    %6 = vector.load %arg3[%c0_4, %c0_5] : memref<1x32xf32, #tpu.memory_space<vmem>>, vector<1x32xf32>
    %cst_6 = arith.constant dense<0.000000e+00> : vector<32xf32>
    %7 = vector.multi_reduction <add>, %5, %cst_6 [0] : vector<64x32xf32> to vector<32xf32>
    %8 = vector.shape_cast %7 : vector<32xf32> to vector<1x32xf32>
    %9 = arith.addf %6, %8 : vector<1x32xf32>
    %c0_7 = arith.constant 0 : index
    %c0_8 = arith.constant 0 : index
    %10 = vector.load %arg3[%c0_7, %c0_8] : memref<1x32xf32, #tpu.memory_space<vmem>>, vector<1x32xf32>
    tpu.vector_store %arg3[%c0_7, %c0_8], %9 {strides = array<i32>} : memref<1x32xf32, #tpu.memory_space<vmem>>, vector<1x32xf32>,
    %c0_9 = arith.constant 0 : index
    %c0_10 = arith.constant 0 : index
    %11 = vector.load %arg4[%c0_9, %c0_10] : memref<1x32xf32, #tpu.memory_space<vmem>>, vector<1x32xf32>
    %12 = arith.mulf %5, %5 : vector<64x32xf32>
    %cst_11 = arith.constant dense<0.000000e+00> : vector<32xf32>
    %13 = vector.multi_reduction <add>, %12, %cst_11 [0] : vector<64x32xf32> to vector<32xf32>
    %14 = vector.shape_cast %13 : vector<32xf32> to vector<1x32xf32>
    %15 = arith.addf %11, %14 : vector<1x32xf32>
    %c0_12 = arith.constant 0 : index
    %c0_13 = arith.constant 0 : index
    %16 = vector.load %arg4[%c0_12, %c0_13] : memref<1x32xf32, #tpu.memory_space<vmem>>, vector<1x32xf32>
    tpu.vector_store %arg4[%c0_12, %c0_13], %15 {strides = array<i32>} : memref<1x32xf32, #tpu.memory_space<vmem>>, vector<1x32xf32>,
    return
  }
  func.func @transform_0(%arg0: i32) -> (i32, i32) {
    %c0_i32 = arith.constant 0 : i32
    %c0_i32_0 = arith.constant 0 : i32
    return %arg0, %c0_i32 : i32, i32
  }
  func.func @transform_1(%arg0: i32) -> (i32, i32) {
    %c0_i32 = arith.constant 0 : i32
    %c0_i32_0 = arith.constant 0 : i32
    %c0_i32_1 = arith.constant 0 : i32
    return %c0_i32, %c0_i32_0 : i32, i32
  }
  func.func @transform_2(%arg0: i32) -> (i32, i32) {
    %c0_i32 = arith.constant 0 : i32
    %c0_i32_0 = arith.constant 0 : i32
    %c0_i32_1 = arith.constant 0 : i32
    return %c0_i32, %c0_i32_0 : i32, i32
  }
  func.func @transform_3(%arg0: i32) -> (i32, i32) {
    %c0_i32 = arith.constant 0 : i32
    %c0_i32_0 = arith.constant 0 : i32
    %c0_i32_1 = arith.constant 0 : i32
    return %c0_i32, %c0_i32_0 : i32, i32
  }
}

</mosaic_0001>

<llo_original>
// kernel: tpu_custom_call.1
$region0: #{tpu_custom_call.1}
  #allocation0 [shape = 'u32[]', space=smem, size = 0x4, offset = 0x4, fixed_abs, tag = 'smem constant byte address 0x4 - core index']
  #allocation1 [shape = 'u32[144,128]{1,0:T(1,128)}', space=vmem, size = 0x12000, scoped, tag = 'internal scratch']
  %s0 = inlined_call_operand.vmem [shape: f32[256,48], index: 0, kind: input, shape index: {}]
  %s1 = inlined_call_operand.vmem [shape: f32[48,32], index: 1, kind: input, shape index: {}]
  %s2 = inlined_call_operand.hbm [shape: f32[1,32], index: 2, kind: output, shape index: {0}]
  %s3 = inlined_call_operand.hbm [shape: f32[1,32], index: 3, kind: output, shape index: {1}]
  %4 = xla_tuple %s2, %s3
  %s5 = sld [smem:[#allocation0]]
  $region53: #{tpu_custom_call.1} parent=0
    _
  %s7 = ssub.s32 1, %s5
  %s8 = scalar_select 0, %s7, %s5
  $region1: #{tpu_custom_call.1} parent=0
    #allocation2 [shape = 'u8[512]{0}', space=vmem, size = 0x400, scoped, tag = 'output window, operand 0, single buffered']
    #allocation3 [shape = 's32[2]{0}', space=sflag, size = 0x8, scoped, tag = 'scoped memory for tpu_custom_call.1']
    #allocation4 [shape = 'u8[512]{0}', space=vmem, size = 0x400, scoped, tag = 'output window, operand 1, single buffered']
    #allocation5 [shape = 's32[1]{0}', space=sflag, size = 0x4, scoped, tag = 'scoped memory for tpu_custom_call.1']
    %9 = vsyncpa [#allocation3], 0
    %10 = vsyncpa [#allocation5], 0
    loop: start=0, step=1, limit=6
    $region2: #{tpu_custom_call.1} parent=1 // loop_pre_header
      _
    $region3: #{tpu_custom_call.1} parent=1 // loop_header
      %s12 = sphi 0, %s16
      %p13 = scmp.ge.s32.totalorder %s12, 6
      %s22 = sphi 0, %s24
      %s25 = sphi 0, %s22
      %s26 = sphi 0, %s25
      %s42 = sphi 0, %s26
      %s46 = sphi 0, %s46
      %s48 = sphi 0, %s46
      %s49 = sphi 0, %s48
      %s63 = sphi 0, %s49
      %s67 = sphi 0, %s67
      %s69 = sphi 0, %s67
      %s70 = sphi 0, %s69
      %s84 = sphi 0, %s70
      %s88 = sphi 0, %s88
      %s90 = sphi 0, %s88
      %s91 = sphi 0, %s90
      %s105 = sphi 0, %s91
    $region4: #{tpu_custom_call.1} parent=1 // loop_header_branch
      %15 = sbr.rel (%p13) target = $region8
    $region5: #{tpu_custom_call.1} parent=1 // loop_body
      %s17 = ssub.s32 %s12, 1
      %s18 = ssub.s32 %s12, 2
      %s19 = sadd.s32 %s12, 1
      %s20 = ssub.s32 %s12, %s19
      %p21 = scmp.eq.s32.totalorder %s20, 0
      %s23 = sadd.s32 %s22, 1
      %s24 = scalar_select %p21, %s22, %s23
      %p27 = pneg %p21
      %p28 = scmp.eq.s32.totalorder %s12, 3
      %p29 = por %p27, %p28
      %p30 = scmp.ne.s32.totalorder %s22, %s25
      %p31 = scmp.eq.s32.totalorder %s12, 0
      %p32 = por %p30, %p31
      %p33 = scmp.ne.s32.totalorder %s22, %s25
      %p34 = scmp.eq.s32.totalorder %s17, 3
      %p35 = por %p33, %p34
      %p36 = scmp.ne.s32.totalorder %s25, %s26
      %p37 = scmp.eq.s32.totalorder %s17, 0
      %p38 = por %p36, %p37
      %p39 = scmp.ne.s32.totalorder %s25, %s26
      %p40 = scmp.eq.s32.totalorder %s18, 3
      %p41 = por %p39, %p40
      %p43 = scmp.ne.s32.totalorder %s26, %s42
      %p44 = scmp.eq.s32.totalorder %s18, 0
      %p45 = por %p43, %p44
      %s47 = sadd.s32 %s46, 1
      %p50 = scmp.eq.s32.totalorder %s12, 3
      %p51 = scmp.ne.s32.totalorder %s46, %s48
      %p52 = scmp.eq.s32.totalorder %s12, 0
      %p53 = por %p51, %p52
      %p54 = scmp.ne.s32.totalorder %s46, %s48
      %p55 = scmp.eq.s32.totalorder %s17, 3
      %p56 = por %p54, %p55
      %p57 = scmp.ne.s32.totalorder %s48, %s49
      %p58 = scmp.eq.s32.totalorder %s17, 0
      %p59 = por %p57, %p58
      %p60 = scmp.ne.s32.totalorder %s48, %s49
      %p61 = scmp.eq.s32.totalorder %s18, 3
      %p62 = por %p60, %p61
      %p64 = scmp.ne.s32.totalorder %s49, %s63
      %p65 = scmp.eq.s32.totalorder %s18, 0
      %p66 = por %p64, %p65
      %s68 = sadd.s32 %s67, 1
      %p71 = scmp.eq.s32.totalorder %s12, 3
      %p72 = scmp.ne.s32.totalorder %s67, %s69
      %p73 = scmp.eq.s32.totalorder %s12, 0
      %p74 = por %p72, %p73
      %p75 = scmp.ne.s32.totalorder %s67, %s69
      %p76 = scmp.eq.s32.totalorder %s17, 3
      %p77 = por %p75, %p76
      %p78 = scmp.ne.s32.totalorder %s69, %s70
      %p79 = scmp.eq.s32.totalorder %s17, 0
      %p80 = por %p78, %p79
      %p81 = scmp.ne.s32.totalorder %s69, %s70
      %p82 = scmp.eq.s32.totalorder %s18, 3
      %p83 = por %p81, %p82
      %p85 = scmp.ne.s32.totalorder %s70, %s84
      %p86 = scmp.eq.s32.totalorder %s18, 0
      %p87 = por %p85, %p86
      %s89 = sadd.s32 %s88, 1
      %p92 = scmp.eq.s32.totalorder %s12, 3
      %p93 = scmp.ne.s32.totalorder %s88, %s90
      %p94 = scmp.eq.s32.totalorder %s12, 0
      %p95 = por %p93, %p94
      %p96 = scmp.ne.s32.totalorder %s88, %s90
      %p97 = scmp.eq.s32.totalorder %s17, 3
      %p98 = por %p96, %p97
      %p99 = scmp.ne.s32.totalorder %s90, %s91
      %p100 = scmp.eq.s32.totalorder %s17, 0
      %p101 = por %p99, %p100
      %p102 = scmp.ne.s32.totalorder %s90, %s91
      %p103 = scmp.eq.s32.totalorder %s18, 3
      %p104 = por %p102, %p103
      %p106 = scmp.ne.s32.totalorder %s91, %s105
      %p107 = scmp.eq.s32.totalorder %s18, 0
      %p108 = por %p106, %p107
      %p109 = scmp.le.s32.totalorder 1, %s12
      %p110 = scmp.lt.s32.totalorder %s12, 5
      %p111 = pnand %p109, %p110
      %p112 = pneg %p111
      // Predicated region
      $region9: #{tpu_custom_call.1} parent=5 // pred_check
        _
      $region10: #{tpu_custom_call.1} parent=5 // pred_check_branch
        %114 = sbr.rel (%p111) target = $region12
      $region11: #{tpu_custom_call.1} parent=5 // pred_region
        %s115 = ssub.s32 %s12, 1
        // Predicated region
        $region13: #{tpu_custom_call.1} parent=11 // pred_check
          %p116 = pneg %p59
        $region14: #{tpu_custom_call.1} parent=11 // pred_check_branch
          %118 = sbr.rel (%p116) target = $region16
        $region15: #{tpu_custom_call.1} parent=11 // pred_region
          _
        $region16: #{tpu_custom_call.1} parent=11 // pred_fallthru
          _
      $region12: #{tpu_custom_call.1} parent=5 // pred_fallthru
        _
      %p119 = scmp.lt.s32.totalorder %s12, 4
      // Predicated region
      $region17: #{tpu_custom_call.1} parent=5 // pred_check
        %p120 = pneg %p119
      $region18: #{tpu_custom_call.1} parent=5 // pred_check_branch
        %122 = sbr.rel (%p120) target = $region20
      $region19: #{tpu_custom_call.1} parent=5 // pred_region
        // Predicated region
        $region21: #{tpu_custom_call.1} parent=19 // pred_check
          %p123 = pneg %p32
        $region22: #{tpu_custom_call.1} parent=19 // pred_check_branch
          %125 = sbr.rel (%p123) target = $region24
        $region23: #{tpu_custom_call.1} parent=19 // pred_region
          %s126 = smul.u32 8, %s12
          %p127 = scmp.lt.s32.totalorder %s126, 31
          %s128 = scalar_select %p127, %s126, 31
          %s129 = smul.addr %s128, 8
          %s130 = scalar_lea.vmem %s0, %s129
          %s131 = smul.u32 8, %s12
        $region24: #{tpu_custom_call.1} parent=19 // pred_fallthru
          _
      $region20: #{tpu_custom_call.1} parent=5 // pred_fallthru
        _
      %p132 = scmp.le.s32.totalorder 1, %s12
      %p133 = scmp.lt.s32.totalorder %s12, 5
      %p134 = pnand %p132, %p133
      %p135 = pneg %p134
      // Predicated region
      $region25: #{tpu_custom_call.1} parent=5 // pred_check
        _
      $region26: #{tpu_custom_call.1} parent=5 // pred_check_branch
        %137 = sbr.rel (%p134) target = $region28
      $region27: #{tpu_custom_call.1} parent=5 // pred_region
        %s138 = ssub.s32 %s12, 1
        %s139 = smul.u32 8, %s17
        %p140 = scmp.lt.s32.totalorder %s139, 31
        %s141 = scalar_select %p140, %s139, 31
        %s142 = smul.addr %s141, 8
        %s143 = scalar_lea.vmem %s0, %s142
        %p144 = pneg %p38
        %p145 = pneg %p35
        %p146 = pneg %p59
        %p147 = pneg %p56
        %p148 = pneg %p80
        %p149 = pneg %p77
        %p150 = pneg %p101
        %p151 = pneg %p98
        %s152 = smul.u32 8, %s17
        %p153 = scmp.lt.s32.totalorder %s152, 31
        %s154 = scalar_select %p153, %s152, 31
        %s155 = smul.addr %s154, 8
        %s156 = scalar_lea.vmem %s0, %s155
        %s157 = smul.u32 8, %s17
        %p158 = scmp.eq.s32.totalorder %s17, 0
        // Predicated region
        $region29: #{tpu_custom_call.1} parent=27 // pred_check
          %p159 = pneg %p158
        $region30: #{tpu_custom_call.1} parent=27 // pred_check_branch
          %161 = sbr.rel (%p159) target = $region32
        $region31: #{tpu_custom_call.1} parent=27 // pred_region
          %vm162 = vcmask 253952
          %163 = vst.msk [vmem:[#allocation2] sm:$0x1] %vm162, 0.0
          %164 = vst.msk [vmem:[#allocation4] sm:$0x1] %vm162, 0.0
        $region32: #{tpu_custom_call.1} parent=27 // pred_fallthru
          _
        %v165 = vld [vmem:[%s156] sm:$0xff]
        %v166 = vld [vmem:[%s156 + $0x8] sm:$0xff]
        %v167 = vld [vmem:[%s156 + $0x10] sm:$0xff]
        %v168 = vld [vmem:[%s156 + $0x18] sm:$0xff]
        %v169 = vld [vmem:[%s156 + $0x20] sm:$0xff]
        %v170 = vld [vmem:[%s156 + $0x28] sm:$0xff]
        %v171 = vld [vmem:[%s156 + $0x30] sm:$0xff]
        %v172 = vld [vmem:[%s156 + $0x38] sm:$0xff]
        %v173 = vld [vmem:[%s1] sm:$0xff]
        %v174 = vld [vmem:[%s1 + $0x8] sm:$0xff]
        %v175 = vld [vmem:[%s1 + $0x10] sm:$0xff]
        %v176 = vld [vmem:[%s1 + $0x18] sm:$0xff]
        %v177 = vld [vmem:[%s1 + $0x20] sm:$0xff]
        %v178 = vld [vmem:[%s1 + $0x28] sm:$0xff]
        %vm179 = vcmask 392192
        %v181 = vsel %vm179, %v165, 0
        %v184 = vsel %vm179, %v166, 0
        %v187 = vsel %vm179, %v167, 0
        %v190 = vsel %vm179, %v168, 0
        %v193 = vsel %vm179, %v169, 0
        %v196 = vsel %vm179, %v170, 0
        %v199 = vsel %vm179, %v171, 0
        %v202 = vsel %vm179, %v172, 0
        %204 = vmatprep.subr.mxu0 0.0
        %205 = vmatpush1.msra.mxu0 %v173
        %206 = vmatprep.subr.mxu0 0.0
        %207 = vmatpush1.msra.mxu0 %v174
        %208 = vmatprep.subr.mxu0 0.0
        %209 = vmatpush1.msra.mxu0 %v175
        %210 = vmatprep.subr.mxu0 0.0
        %211 = vmatpush1.msra.mxu0 %v176
        %212 = vmatprep.subr.mxu0 0.0
        %213 = vmatpush1.msra.mxu0 %v177
        %214 = vmatprep.subr.mxu0 0.0
        %215 = vmatpush1.msra.mxu0 %v178
        %216 = vmatprep.subr.mxu0 0.0
        %217 = vmatpush1.msra.mxu0 0.0
        %218 = vmatprep.subr.mxu0 0.0
        %219 = vmatpush1.msra.mxu0 0.0
        %220 = vmatprep.subr.mxu0 0.0
        %221 = vmatpush1.msra.mxu0 0.0
        %222 = vmatprep.subr.mxu0 0.0
        %223 = vmatpush1.msra.mxu0 0.0
        %224 = vmatprep.subr.mxu0 0.0
        %225 = vmatpush1.msra.mxu0 0.0
        %226 = vmatprep.subr.mxu0 0.0
        %227 = vmatpush1.msra.mxu0 0.0
        %228 = vmatprep.subr.mxu0 0.0
        %229 = vmatpush1.msra.mxu0 0.0
        %230 = vmatprep.subr.mxu0 0.0
        %231 = vmatpush1.msra.mxu0 0.0
        %232 = vmatprep.subr.mxu0 0.0
        %233 = vmatpush1.msra.mxu0 0.0
        %234 = vmatprep.subr.mxu0 0.0
        %235 = vmatpush1.msra.mxu0 0.0
        %236 = vmatprep.subr.mxu0 0.0
        %237 = vmatpush1.msra.mxu0 0.0
        %238 = vmatprep.subr.mxu0 0.0
        %239 = vmatpush1.msra.mxu0 0.0
        %240 = vmatprep.subr.mxu0 0.0
        %241 = vmatpush1.msra.mxu0 0.0
        %242 = vmatprep.subr.mxu0 0.0
        %243 = vmatpush1.msra.mxu0 0.0
        %244 = vmatprep.subr.mxu0 0.0
        %245 = vmatpush1.msra.mxu0 0.0
        %246 = vmatprep.subr.mxu0 0.0
        %247 = vmatpush1.msra.mxu0 0.0
        %248 = vmatprep.subr.mxu0 0.0
        %249 = vmatpush1.msra.mxu0 0.0
        %250 = vmatprep.subr.mxu0 0.0
        %251 = vmatpush1.msra.mxu0 0.0
        %252 = vmatprep.subr.mxu0 0.0
        %253 = vmatpush1.msra.mxu0 0.0
        %254 = vmatprep.subr.mxu0 0.0
        %255 = vmatpush1.msra.mxu0 0.0
        %256 = vmatprep.subr.mxu0 0.0
        %257 = vmatpush1.msra.mxu0 0.0
        %258 = vmatprep.subr.mxu0 0.0
        %259 = vmatpush1.msra.mxu0 0.0
        %260 = vmatprep.subr.mxu0 0.0
        %261 = vmatpush1.msra.mxu0 0.0
        %262 = vmatprep.subr.mxu0 0.0
        %263 = vmatpush1.msra.mxu0 0.0
        %264 = vmatprep.subr.mxu0 0.0
        %265 = vmatpush1.msra.mxu0 0.0
        %266 = vmatprep.subr.mxu0 0.0
        %267 = vmatpush1.msra.mxu0 0.0
        %268 = vmatprep.mubr.f32.mxu0 0.0
        %269 = vmatmul.mubr.f32.gmra.mrb[0].mxu0 %v181
        %v270 = vpop.f32.mrb[0].mxu0
        %v271 = vadd.f32 0.0, %v270
        %v272 = vpop.f32.mrb[0].mxu0
        %273 = vmatprep.mubr.f32.mxu0 0.0
        %274 = vmatmul.mubr.f32.gmra.mrb[0].mxu0 %v184
        %v275 = vpop.f32.mrb[0].mxu0
        %v276 = vadd.f32 0.0, %v275
        %v277 = vpop.f32.mrb[0].mxu0
        %278 = vmatprep.mubr.f32.mxu0 0.0
        %279 = vmatmul.mubr.f32.gmra.mrb[0].mxu0 %v187
        %v280 = vpop.f32.mrb[0].mxu0
        %v281 = vadd.f32 0.0, %v280
        %v282 = vpop.f32.mrb[0].mxu0
        %283 = vmatprep.mubr.f32.mxu0 0.0
        %284 = vmatmul.mubr.f32.gmra.mrb[0].mxu0 %v190
        %v285 = vpop.f32.mrb[0].mxu0
        %v286 = vadd.f32 0.0, %v285
        %v287 = vpop.f32.mrb[0].mxu0
        %288 = vmatprep.mubr.f32.mxu0 0.0
        %289 = vmatmul.mubr.f32.gmra.mrb[0].mxu0 %v193
        %v290 = vpop.f32.mrb[0].mxu0
        %v291 = vadd.f32 0.0, %v290
        %v292 = vpop.f32.mrb[0].mxu0
        %293 = vmatprep.mubr.f32.mxu0 0.0
        %294 = vmatmul.mubr.f32.gmra.mrb[0].mxu0 %v196
        %v295 = vpop.f32.mrb[0].mxu0
        %v296 = vadd.f32 0.0, %v295
        %v297 = vpop.f32.mrb[0].mxu0
        %298 = vmatprep.mubr.f32.mxu0 0.0
        %299 = vmatmul.mubr.f32.gmra.mrb[0].mxu0 %v199
        %v300 = vpop.f32.mrb[0].mxu0
        %v301 = vadd.f32 0.0, %v300
        %v302 = vpop.f32.mrb[0].mxu0
        %303 = vmatprep.mubr.f32.mxu0 0.0
        %304 = vmatmul.mubr.f32.gmra.mrb[0].mxu0 %v202
        %v305 = vpop.f32.mrb[0].mxu0
        %v306 = vadd.f32 0.0, %v305
        %v307 = vpop.f32.mrb[0].mxu0
        %308 = vdwg.mxu0
        %v309 = vld [vmem:[#allocation2] sm:$0x1]
        %vm310 = vcmask 261120
        %v311 = vsel %vm310, %v271, 0.0
        %v312 = vsel %vm310, %v276, 0.0
        %v313 = vadd.f32 %v311, %v312
        %v314 = vsel %vm310, %v281, 0.0
        %v315 = vadd.f32 %v313, %v314
        %v316 = vsel %vm310, %v286, 0.0
        %v317 = vadd.f32 %v315, %v316
        %v318 = vsel %vm310, %v291, 0.0
        %v319 = vadd.f32 %v317, %v318
        %v320 = vsel %vm310, %v296, 0.0
        %v321 = vadd.f32 %v319, %v320
        %v322 = vsel %vm310, %v301, 0.0
        %v323 = vadd.f32 %v321, %v322
        %v324 = vsel %vm310, %v306, 0.0
        %v325 = vadd.f32 %v323, %v324
        %v326 = vrot.slane %v325, 4
        %v327 = vadd.f32 %v325, %v326
        %v328 = vrot.slane %v327, 2
        %v329 = vadd.f32 %v327, %v328
        %v330 = vrot.slane %v329, 1
        %v331 = vadd.f32 %v329, %v330
        %v332 = vadd.f32 %v309, %v331
        %vm333 = vcmask 253952
        %334 = vst.msk [vmem:[#allocation2] sm:$0x1] %vm333, %v332
        %v335 = vld [vmem:[#allocation4] sm:$0x1]
        %v336 = vmul.f32 %v271, %v271
        %v337 = vmul.f32 %v276, %v276
        %v338 = vmul.f32 %v281, %v281
        %v339 = vmul.f32 %v286, %v286
        %v340 = vmul.f32 %v291, %v291
        %v341 = vmul.f32 %v296, %v296
        %v342 = vmul.f32 %v301, %v301
        %v343 = vmul.f32 %v306, %v306
        %v344 = vsel %vm310, %v336, 0.0
        %v345 = vsel %vm310, %v337, 0.0
        %v346 = vadd.f32 %v344, %v345
        %v347 = vsel %vm310, %v338, 0.0
        %v348 = vadd.f32 %v346, %v347
        %v349 = vsel %vm310, %v339, 0.0
        %v350 = vadd.f32 %v348, %v349
        %v351 = vsel %vm310, %v340, 0.0
        %v352 = vadd.f32 %v350, %v351
        %v353 = vsel %vm310, %v341, 0.0
        %v354 = vadd.f32 %v352, %v353
        %v355 = vsel %vm310, %v342, 0.0
        %v356 = vadd.f32 %v354, %v355
        %v357 = vsel %vm310, %v343, 0.0
        %v358 = vadd.f32 %v356, %v357
        %v359 = vrot.slane %v358, 4
        %v360 = vadd.f32 %v358, %v359
        %v361 = vrot.slane %v360, 2
        %v362 = vadd.f32 %v360, %v361
        %v363 = vrot.slane %v362, 1
        %v364 = vadd.f32 %v362, %v363
        %v365 = vadd.f32 %v335, %v364
        %366 = vst.msk [vmem:[#allocation4] sm:$0x1] %vm333, %v365
        // Predicated region
        $region33: #{tpu_custom_call.1} parent=27 // pred_check
          %p367 = pneg %p77
        $region34: #{tpu_custom_call.1} parent=27 // pred_check_branch
          %369 = sbr.rel (%p367) target = $region36
        $region35: #{tpu_custom_call.1} parent=27 // pred_region
          %s371 = ssub.s32 16, 16
          %372 = vsyncadd [#allocation3], %s371
          %s374 = sshll.u32 [#allocation2], 4
          %s375 = int_to_ptr.vmem [resolvable:$true] %s374
          %377 = dma.vmem_to_hbm [thread:$0]  %s375, 16, %s2, [#allocation3]
        $region36: #{tpu_custom_call.1} parent=27 // pred_fallthru
          _
        // Predicated region
        $region37: #{tpu_custom_call.1} parent=27 // pred_check
          %p378 = pneg %p98
        $region38: #{tpu_custom_call.1} parent=27 // pred_check_branch
          %380 = sbr.rel (%p378) target = $region40
        $region39: #{tpu_custom_call.1} parent=27 // pred_region
          %s382 = ssub.s32 16, 16
          %383 = vsyncadd [#allocation5], %s382
          %s385 = sshll.u32 [#allocation4], 4
          %s386 = int_to_ptr.vmem [resolvable:$true] %s385
          %388 = dma.vmem_to_hbm [thread:$0]  %s386, 16, %s3, [#allocation5]
        $region40: #{tpu_custom_call.1} parent=27 // pred_fallthru
          _
        // Predicated region
        $region41: #{tpu_custom_call.1} parent=27 // pred_check
          %p389 = pneg %p77
        $region42: #{tpu_custom_call.1} parent=27 // pred_check_branch
          %391 = sbr.rel (%p389) target = $region44
        $region43: #{tpu_custom_call.1} parent=27 // pred_region
          %392 = dma.done [#allocation3], 16
        $region44: #{tpu_custom_call.1} parent=27 // pred_fallthru
          _
        // Predicated region
        $region45: #{tpu_custom_call.1} parent=27 // pred_check
          %p393 = pneg %p98
        $region46: #{tpu_custom_call.1} parent=27 // pred_check_branch
          %395 = sbr.rel (%p393) target = $region48
        $region47: #{tpu_custom_call.1} parent=27 // pred_region
          %396 = dma.done [#allocation5], 16
        $region48: #{tpu_custom_call.1} parent=27 // pred_fallthru
          _
      $region28: #{tpu_custom_call.1} parent=5 // pred_fallthru
        _
      %p397 = scmp.le.s32.totalorder 2, %s12
      // Predicated region
      $region49: #{tpu_custom_call.1} parent=5 // pred_check
        %p398 = pneg %p397
      $region50: #{tpu_custom_call.1} parent=5 // pred_check_branch
        %400 = sbr.rel (%p398) target = $region52
      $region51: #{tpu_custom_call.1} parent=5 // pred_region
        %s401 = ssub.s32 %s12, 2
      $region52: #{tpu_custom_call.1} parent=5 // pred_fallthru
        _
    $region6: #{tpu_custom_call.1} parent=1 // loop_footer
      %s16 = sadd.s32 1, %s12
    $region7: #{tpu_custom_call.1} parent=1 // loop_footer_branch
      %11 = sbr.rel target = $region3
    $region8: #{tpu_custom_call.1} parent=1 // loop_exit
      _
    %402 = vsyncpa [#allocation3], 1
    %s403 = scalar_lea.sflag [#allocation3], 1
    %404 = vsyncpa %s403, 1
    %405 = vsyncpa [#allocation5], 1

</llo_original>
